<compile_context>
chip_gen: v5e
topology: v5e:2x2
jax: 0.10.0
libtpu: 0.0.40
codegen_flags: <defaults>
</compile_context>

<pallas_src>
import jax
import jax.numpy as jnp
from jax.experimental import pallas as pl
from jax.experimental.pallas import tpu as pltpu


# ------------------------------- helpers ----------------------------------

def _round_up(x, m):
    return (x + m - 1) // m * m


def _vmem_config():
    """(vmem_limit_bytes, pipeline_budget_bytes), generation-aware."""
    phys = 0
    try:
        phys = int(getattr(pltpu.get_tpu_info(), "vmem_capacity_bytes", 0))
    except Exception:
        phys = 0
    if phys >= 128 * 1024 * 1024:          # v5e / v6e: 128 MiB physical VMEM
        return 96 * 1024 * 1024, 24 * 1024 * 1024
    return 32 * 1024 * 1024, 8 * 1024 * 1024   # v7x (64 MiB) or unknown: conservative


# ----------------------------- Pallas kernels -----------------------------

def _fused_mlp_kernel(x_ref, wa_ref, ba_ref, wr_ref, br_ref, oa_ref, or_ref):
    # One read of x, two fused matmuls (arc heads / rel heads), LeakyReLU(0.1) in f32.
    x = x_ref[...]
    ya = jnp.dot(x, wa_ref[...], preferred_element_type=jnp.float32)
    ya = ya + ba_ref[...].astype(jnp.float32)
    oa_ref[...] = jnp.where(ya > 0, ya, 0.1 * ya).astype(oa_ref.dtype)
    yr = jnp.dot(x, wr_ref[...], preferred_element_type=jnp.float32)
    yr = yr + br_ref[...].astype(jnp.float32)
    or_ref[...] = jnp.where(yr > 0, yr, 0.1 * yr).astype(or_ref.dtype)


def fused_mlp(x2d, wa, ba, wr, br, vmem_limit, budget):
    """x2d: (M, Din) bf16 -> ((M, 2*A_pad), (M, 2*R_pad)) bf16; M tiled + pipelined."""
    M, Din = x2d.shape
    Da, Dr = wa.shape[1], wr.shape[1]
    # budget accounting: double-buffered bf16 weight/bias blocks are a fixed cost;
    # per-row cost = double-buffered bf16 x/out blocks + f32 temporaries.
    fixed = 2 * 2 * Din * (Da + Dr) + 2 * 2 * (Da + Dr)
    per_row = 2 * 2 * (Din + Da + Dr) + 4 * (Da + Dr)
    tile_m = 128                                  # M = B*S_pad is a multiple of 128
    for t in (1024, 512, 256):
        if M % t == 0 and fixed + per_row * t <= budget:
            tile_m = t
            break
    return pl.pallas_call(
        _fused_mlp_kernel,
        out_shape=(jax.ShapeDtypeStruct((M, Da), jnp.bfloat16),
                   jax.ShapeDtypeStruct((M, Dr), jnp.bfloat16)),
        grid_spec=pltpu.PrefetchScalarGridSpec(
            num_scalar_prefetch=0,
            grid=(M // tile_m,),
            in_specs=[pl.BlockSpec((tile_m, Din), lambda i: (i, 0)),
                      pl.BlockSpec((Din, Da), lambda i: (0, 0)),
                      pl.BlockSpec((1, Da), lambda i: (0, 0)),
                      pl.BlockSpec((Din, Dr), lambda i: (0, 0)),
                      pl.BlockSpec((1, Dr), lambda i: (0, 0))],
            out_specs=[pl.BlockSpec((tile_m, Da), lambda i: (i, 0)),
                       pl.BlockSpec((tile_m, Dr), lambda i: (i, 0))],
        ),
        compiler_params=pltpu.CompilerParams(
            dimension_semantics=("parallel",),
            vmem_limit_bytes=vmem_limit),
    )(x2d, wa, ba, wr, br)


def _arc_kernel(lens_ref, h_ref, d_ref, w_ref, o_ref):
    # s_arc[x, y] = ([arc_d_x, 1, 0..] @ W_pad) . arc_h_pad_y   (ones col folded into act)
    b = pl.program_id(0)
    s_pad = h_ref.shape[1]
    t = jnp.dot(d_ref[0], w_ref[...], preferred_element_type=jnp.float32)
    s = jax.lax.dot_general(t.astype(jnp.bfloat16), h_ref[0],
                            (((1,), (1,)), ((), ())),
                            preferred_element_type=jnp.float32)       # (tile_q, S_pad)
    # masked_fill over the HEAD (column) axis; (1, S_pad) iota broadcast over rows.
    col = jax.lax.broadcasted_iota(jnp.int32, (1, s_pad), 1)
    o_ref[0] = jnp.where(col < lens_ref[b], s, jnp.float32(-100000.0))


def arc_biaffine(lens, act_arc, arc_w, vmem_limit, budget):
    B, S_pad, two_a = act_arc.shape
    A_pad = two_a // 2

    def fits(tq):
        b = (2 * S_pad * A_pad * 2          # arc_h block (resident across q, 2 bufs)
             + 2 * tq * A_pad * 2           # arc_d tile
             + 2 * A_pad * A_pad * 2        # W
             + 2 * tq * S_pad * 4           # f32 out tile
             + tq * A_pad * 4 + 2 * tq * S_pad * 4)   # f32 temporaries
        return b <= budget

    tile_q = 128
    for t in (512, 256):
        if S_pad % t == 0 and fits(t):
            tile_q = t
            break

    return pl.pallas_call(
        _arc_kernel,
        out_shape=jax.ShapeDtypeStruct((B, S_pad, S_pad), jnp.float32),
        grid_spec=pltpu.PrefetchScalarGridSpec(
            num_scalar_prefetch=1,
            grid=(B, S_pad // tile_q),
            in_specs=[
                # act_arc passed twice with different views: full arc_h rows (cols 0:A_pad)
                # and the q-tile of arc_d (cols A_pad:2*A_pad) — both 128-aligned slices.
                pl.BlockSpec((1, S_pad, A_pad), lambda b, q, lens: (b, 0, 0)),
                pl.BlockSpec((1, tile_q, A_pad), lambda b, q, lens: (b, q, 1)),
                pl.BlockSpec((A_pad, A_pad), lambda b, q, lens: (0, 0))],
            out_specs=pl.BlockSpec((1, tile_q, S_pad), lambda b, q, lens: (b, q, 0)),
        ),
        compiler_params=pltpu.CompilerParams(
            dimension_semantics=("parallel", "parallel"),
            vmem_limit_bytes=vmem_limit),
    )(lens, act_arc, act_arc, arc_w)


def _rel_kernel(d_ref, h_ref, w_ref, o_ref):
    # For each rel o in the group: s_o = (rel_d1 @ W_o_pad) @ rel_h1^T, where the "ones"
    # columns of rel_d1/rel_h1 were folded into the MLP bias -> pure matmuls, K = R_pad.
    G = o_ref.shape[1]
    R_pad = h_ref.shape[2]
    d = d_ref[0]                                                     # (tile_q, R_pad)
    h = h_ref[0]                                                     # (S_pad, R_pad)
    t_all = jnp.dot(d, w_ref[...], preferred_element_type=jnp.float32)
    t_all = t_all.astype(jnp.bfloat16)                               # (tile_q, G*R_pad)
    for o in range(G):                                               # unrolled, K=R_pad>=128
        s = jax.lax.dot_general(t_all[:, o * R_pad:(o + 1) * R_pad], h,
                                (((1,), (1,)), ((), ())),
                                preferred_element_type=jnp.float32)  # (tile_q, S_pad)
        o_ref[0, o] = s.astype(o_ref.dtype)                          # bf16 store


def rel_biaffine(act_rel, wxy_all, n_rels, vmem_limit, budget):
    B, S_pad, two_r = act_rel.shape
    R_pad = two_r // 2
    group_cands = [g for g in (8, 6, 4, 3, 2, 1) if g <= n_rels and n_rels % g == 0]

    def fits(tq, g):
        b = (2 * S_pad * R_pad * 2          # rel_h block (resident across q/g, 2 bufs)
             + 2 * tq * R_pad * 2           # rel_d tile
             + 2 * R_pad * g * R_pad * 2    # rel-group weights
             + 2 * g * tq * S_pad * 2       # bf16 out tile
             + 6 * tq * g * R_pad           # t_all f32 + bf16
             + 2 * tq * S_pad * 4)          # f32 score temporaries
        return b <= budget

    tile_q, G = 128, 1
    found = False
    for t in (512, 256, 128):
        if S_pad % t != 0:
            continue
        for g in group_cands:
            if fits(t, g):
                tile_q, G, found = t, g, True
                break
        if found:
            break

    return pl.pallas_call(
        _rel_kernel,
        out_shape=jax.ShapeDtypeStruct((B, n_rels, S_pad, S_pad), jnp.bfloat16),
        grid_spec=pltpu.PrefetchScalarGridSpec(
            num_scalar_prefetch=0,
            grid=(B, S_pad // tile_q, n_rels // G),
            in_specs=[
                # act_rel passed twice: q-tile of rel_d (cols 0:R_pad) and full rel_h rows
                # (cols R_pad:2*R_pad) — both 128-aligned; rel_h is resident across q/g.
                pl.BlockSpec((1, tile_q, R_pad), lambda b, q, g: (b, q, 0)),
                pl.BlockSpec((1, S_pad, R_pad), lambda b, q, g: (b, 0, 1)),
                pl.BlockSpec((R_pad, G * R_pad), lambda b, q, g: (0, g))],
            out_specs=pl.BlockSpec((1, G, tile_q, S_pad), lambda b, q, g: (b, g, q, 0)),
        ),
        compiler_params=pltpu.CompilerParams(
            dimension_semantics=("parallel", "parallel", "parallel"),
            vmem_limit_bytes=vmem_limit),
    )(act_rel, act_rel, wxy_all)


# ------------------------------- model glue --------------------------------

def init_params(key, d_in, n_mlp_arc, n_mlp_rel, n_rels):
    ks = jax.random.split(key, 10)

    def lin(kw, kb, din, dout):
        return (jax.random.normal(kw, (din, dout), jnp.float32) * 0.1,
                jax.random.normal(kb, (1, dout), jnp.float32) * 0.1)

    p = {}
    p['w_arc_h'], p['b_arc_h'] = lin(ks[0], ks[1], d_in, n_mlp_arc)
    p['w_arc_d'], p['b_arc_d'] = lin(ks[2], ks[3], d_in, n_mlp_arc)
    p['w_rel_d'], p['b_rel_d'] = lin(ks[4], ks[5], d_in, n_mlp_rel)
    p['w_rel_h'], p['b_rel_h'] = lin(ks[6], ks[7], d_in, n_mlp_rel)
    # Biaffine weights (full, as in torch): arc (1, A+1, A) squeezed; rel (n_rels, R+1, R+1)
    p['arc_W_full'] = jax.random.normal(ks[8], (n_mlp_arc + 1, n_mlp_arc), jnp.float32) * 0.1
    p['rel_W_full'] = jax.random.normal(ks[9], (n_rels, n_mlp_rel + 1, n_mlp_rel + 1),
                                        jnp.float32) * 0.1
    return p


def real_forward(params, x, lens):
    """x: (B, S, 2*n_lstm_hidden) BiLSTM output; lens: (B,) int32.  Jittable.

    Returns (s_arc, s_rel, mask) with s_rel in (B, n_rels, S, S) layout (the torch
    module's trailing .permute(0,2,3,1) is folded into the consumers instead of paying
    a full extra HBM pass on the largest tensor).  Rows >= lens[b] are unmasked garbage,
    matching torch semantics; s_rel is bf16.
    """
    B, S, Din = x.shape
    A = params['w_arc_h'].shape[1]
    R = params['w_rel_d'].shape[1]
    n_rels = params['rel_W_full'].shape[0]
    A_pad = _round_up(A + 1, 128)          # +1 spare slot for the folded "ones" column
    R_pad = _round_up(R + 1, 128)
    S_pad = _round_up(S, 128)              # lane-dense score tiles; sliced off below
    vmem_limit, budget = _vmem_config()

    mask = jnp.arange(S)[None, :] < lens[:, None]                    # (B, S) bool

    # --- MLP weight packing: 128-aligned segments, biaffine ones-columns folded into
    #     the bias (zero weight column + bias 1.0 -> LeakyReLU(1) = 1 for every row) ---
    def seg(w, b, dpad, ones_at=None):
        d = w.shape[1]
        w_p = jnp.zeros((Din, dpad), jnp.float32).at[:, :d].set(w)
        b_p = jnp.zeros((1, dpad), jnp.float32).at[:, :d].set(b)
        if ones_at is not None:
            b_p = b_p.at[0, ones_at].set(1.0)
        return w_p, b_p

    w_arc_h, b_arc_h = seg(params['w_arc_h'], params['b_arc_h'], A_pad)
    w_arc_d, b_arc_d = seg(params['w_arc_d'], params['b_arc_d'], A_pad, ones_at=A)
    w_rel_d, b_rel_d = seg(params['w_rel_d'], params['b_rel_d'], R_pad, ones_at=R)
    w_rel_h, b_rel_h = seg(params['w_rel_h'], params['b_rel_h'], R_pad, ones_at=R)

    w_arc_all = jnp.concatenate([w_arc_h, w_arc_d], 1).astype(jnp.bfloat16)
    b_arc_all = jnp.concatenate([b_arc_h, b_arc_d], 1).astype(jnp.bfloat16)
    w_rel_all = jnp.concatenate([w_rel_d, w_rel_h], 1).astype(jnp.bfloat16)
    b_rel_all = jnp.concatenate([b_rel_d, b_rel_h], 1).astype(jnp.bfloat16)

    x_p = jnp.pad(x, ((0, 0), (0, S_pad - S), (0, 0))).astype(jnp.bfloat16)
    act_arc, act_rel = fused_mlp(x_p.reshape(B * S_pad, Din),
                                 w_arc_all, b_arc_all, w_rel_all, b_rel_all,
                                 vmem_limit, budget)
    act_arc = act_arc.reshape(B, S_pad, 2 * A_pad)   # cols: [arc_h | arc_d(+ones)]
    act_rel = act_rel.reshape(B, S_pad, 2 * R_pad)   # cols: [rel_d(+ones) | rel_h(+ones)]

    # --- biaffine weight packing (padded; bias rows/cols live in the padded slots) ---
    arc_w = jnp.zeros((A_pad, A_pad), jnp.float32).at[:A + 1, :A].set(
        params['arc_W_full']).astype(jnp.bfloat16)                        # (A_pad, A_pad)
    wf = jnp.zeros((n_rels, R_pad, R_pad), jnp.float32).at[:, :R + 1, :R + 1].set(
        params['rel_W_full'])
    wxy_all = jnp.transpose(wf, (1, 0, 2)).reshape(
        R_pad, n_rels * R_pad).astype(jnp.bfloat16)                       # (R_pad, n_rels*R_pad)

    s_arc_p = arc_biaffine(lens, act_arc, arc_w, vmem_limit, budget)
    s_rel_p = rel_biaffine(act_rel, wxy_all, n_rels, vmem_limit, budget)

    s_arc = s_arc_p[:, :S, :S]
    s_rel = s_rel_p[:, :, :S, :S]          # (B, n_rels, S, S) bf16 — rel axis stays at dim 1

    # torch .squeeze(0) only drops dim 0 when batch == 1 (no-op otherwise)
    if B == 1:
        s_arc, s_rel = s_arc[0], s_rel[0]
    return s_arc, s_rel, mask


def forward_loss(params, x, lens, arc_gold, rel_gold):
    """Reproduces Model.forward(): masked arc/rel cross-entropy loss.

    Indexes the rel axis of s_rel at dim 1 (kernel layout) and gathers the gold-head
    column BEFORE any layout change, so the big score tensor is never transposed.
    NOTE: uses boolean-mask indexing (dynamic shapes) -> eager-only, not jittable.
    """
    s_arc, s_rel, mask = real_forward(params, x, lens)
    mask = mask.at[:, 0].set(False)
    total = jnp.sum(mask)
    B, L = s_arc.shape[:2]
    n_rels = s_rel.shape[1]

    logp = jax.nn.log_softmax(s_arc.reshape(-1, L), axis=-1)
    ce_arc = -jnp.take_along_axis(logp, arc_gold.reshape(-1, 1), axis=-1)[:, 0]
    arc_loss = jnp.sum(ce_arc.reshape(arc_gold.shape) * mask)

    # gather gold-head columns first: (B, n_rels, S, S) -> (B, n_rels, S); then only the
    # small slab is rearranged to (B, S, n_rels).
    head = jnp.broadcast_to(arc_gold[:, None, :, None], (B, n_rels, L, 1))
    sel = jnp.take_along_axis(s_rel, head, axis=-1)[..., 0]
    sel = jnp.transpose(sel, (0, 2, 1)).astype(jnp.float32)          # (B, S, n_rels)
    rels_scores = sel[mask]                                          # (N, n_rels)
    logp_r = jax.nn.log_softmax(rels_scores, axis=-1)
    ce_rel = -jnp.take_along_axis(logp_r, rel_gold.reshape(-1, 1), axis=-1)[:, 0]
    rel_loss = jnp.sum(ce_rel)
    return arc_loss + rel_loss / total


# pure-JAX (f32) reference of real_forward for a sanity check
def real_forward_ref(params, x, lens):
    B, S, _ = x.shape
    mask = jnp.arange(S)[None, :] < lens[:, None]

    def mlp_ref(x, w, b):
        y = x @ w + b
        return jnp.where(y > 0, y, 0.1 * y)

    arc_h = mlp_ref(x, params['w_arc_h'], params['b_arc_h'])
    arc_d = mlp_ref(x, params['w_arc_d'], params['b_arc_d'])
    rel_d = mlp_ref(x, params['w_rel_d'], params['b_rel_d'])
    rel_h = mlp_ref(x, params['w_rel_h'], params['b_rel_h'])

    ones = jnp.ones(arc_d.shape[:-1] + (1,), jnp.float32)
    arc_d1 = jnp.concatenate([arc_d, ones], -1)
    s_arc = jnp.einsum('bxi,ij,byj->bxy', arc_d1, params['arc_W_full'], arc_h)
    s_arc = jnp.where(mask[:, None, :], s_arc, -100000.0)

    rel_d1 = jnp.concatenate([rel_d, ones], -1)
    rel_h1 = jnp.concatenate([rel_h, ones], -1)
    # (B, n_rels, S, S) — same layout as the Pallas path (no permute)
    s_rel = jnp.einsum('bxi,oij,byj->boxy', rel_d1, params['rel_W_full'], rel_h1)
    return s_arc, s_rel, mask


if __name__ == "__main__":
    B, S = 2, 8
    n_lstm_hidden = 16
    d_in = 2 * n_lstm_hidden          # BiLSTM output width
    n_mlp_arc, n_mlp_rel, n_rels = 32, 16, 4

    key = jax.random.PRNGKey(0)
    k_x, k_p, k_arc, k_rel = jax.random.split(key, 4)

    x = jax.random.normal(k_x, (B, S, d_in), jnp.float32)   # BiLSTM output (see TODO)
    lens = jnp.array([8, 6], jnp.int32)
    params = init_params(k_p, d_in, n_mlp_arc, n_mlp_rel, n_rels)

    s_arc, s_rel, mask = real_forward(params, x, lens)
    jax.block_until_ready((s_arc, s_rel))

    # sanity check vs pure-f32 reference (loose tol: bf16 MXU inputs + bf16 s_rel output)
    s_arc_ref, s_rel_ref, _ = real_forward_ref(params, x, lens)
    assert s_arc.shape == s_arc_ref.shape and s_rel.shape == s_rel_ref.shape
    assert jnp.allclose(s_arc, s_arc_ref, rtol=1e-1, atol=1e-1)
    assert jnp.allclose(s_rel.astype(jnp.float32), s_rel_ref, rtol=1e-1, atol=1e-1)

    # synthetic gold annotations (sentence.heads / sentence.rels)
    arc_gold = jax.random.randint(k_arc, (B, S), 0, S, dtype=jnp.int32)
    n_valid = int(jnp.sum(mask.at[:, 0].set(False)))
    rel_gold = jax.random.randint(k_rel, (n_valid,), 0, n_rels, dtype=jnp.int32)

    loss = forward_loss(params, x, lens, arc_gold, rel_gold)
    jax.block_until_ready(loss)
    assert bool(jnp.isfinite(loss))

    print("KERNEL_OK")
</pallas_src>

<mosaic_0001>
module attributes {stable_mosaic.version = 11 : i64} {
  func.func @_fused_mlp_kernel(%arg0: i32, %arg1: memref<256x32xbf16, #tpu.memory_space<vmem>>, %arg2: memref<32x256xbf16, #tpu.memory_space<vmem>>, %arg3: memref<1x256xbf16, #tpu.memory_space<vmem>>, %arg4: memref<32x256xbf16, #tpu.memory_space<vmem>>, %arg5: memref<1x256xbf16, #tpu.memory_space<vmem>>, %arg6: memref<256x256xbf16, #tpu.memory_space<vmem>>, %arg7: memref<256x256xbf16, #tpu.memory_space<vmem>>) attributes {dimension_semantics = [#tpu.dimension_semantics<parallel>], iteration_bounds = array<i64: 1>, scalar_prefetch = 0 : i64, scratch_operands = 0 : i64, tpu.core_type = #tpu.core_type<tc>, window_params = [{transform_indices = @transform_0, window_bounds = array<i64: 256, 32>}, {pipeline_mode = #tpu.pipeline_mode<synchronous>, transform_indices = @transform_1, window_bounds = array<i64: 32, 256>}, {pipeline_mode = #tpu.pipeline_mode<synchronous>, transform_indices = @transform_2, window_bounds = array<i64: 1, 256>}, {pipeline_mode = #tpu.pipeline_mode<synchronous>, transform_indices = @transform_3, window_bounds = array<i64: 32, 256>}, {pipeline_mode = #tpu.pipeline_mode<synchronous>, transform_indices = @transform_4, window_bounds = array<i64: 1, 256>}, {transform_indices = @transform_5, window_bounds = array<i64: 256, 256>}, {transform_indices = @transform_6, window_bounds = array<i64: 256, 256>}]} {
    %c0 = arith.constant 0 : index
    %c0_0 = arith.constant 0 : index
    %0 = vector.load %arg1[%c0, %c0_0] : memref<256x32xbf16, #tpu.memory_space<vmem>>, vector<256x32xbf16>
    %c0_1 = arith.constant 0 : index
    %c0_2 = arith.constant 0 : index
    %1 = vector.load %arg2[%c0_1, %c0_2] : memref<32x256xbf16, #tpu.memory_space<vmem>>, vector<32x256xbf16>
    %cst = arith.constant dense<0.000000e+00> : vector<256x256xf32>
    %2 = tpu.matmul %0, %1, %cst {dimension_numbers = #tpu.dot_dimension_numbers<[1], [0], [0], [1], [0, 0, 1, 1], [], []>} : vector<256x32xbf16>, vector<32x256xbf16>, vector<256x256xf32> -> vector<256x256xf32>
    %c0_3 = arith.constant 0 : index
    %c0_4 = arith.constant 0 : index
    %3 = vector.load %arg3[%c0_3, %c0_4] : memref<1x256xbf16, #tpu.memory_space<vmem>>, vector<1x256xbf16>
    %4 = arith.extf %3 : vector<1x256xbf16> to vector<1x256xf32>
    %5 = vector.broadcast %4 : vector<1x256xf32> to vector<256x256xf32>
    %6 = arith.addf %2, %5 : vector<256x256xf32>
    %cst_5 = arith.constant 0.000000e+00 : f32
    %7 = vector.broadcast %cst_5 : f32 to vector<256x256xf32>
    %8 = arith.cmpf ogt, %6, %7 : vector<256x256xf32>
    %cst_6 = arith.constant 1.000000e-01 : f32
    %9 = vector.broadcast %cst_6 : f32 to vector<256x256xf32>
    %10 = arith.mulf %9, %6 : vector<256x256xf32>
    %11 = arith.select %8, %6, %10 : vector<256x256xi1>, vector<256x256xf32>
    %12 = arith.truncf %11 : vector<256x256xf32> to vector<256x256xbf16>
    %c0_7 = arith.constant 0 : index
    %c0_8 = arith.constant 0 : index
    %13 = vector.load %arg6[%c0_7, %c0_8] : memref<256x256xbf16, #tpu.memory_space<vmem>>, vector<256x256xbf16>
    tpu.vector_store %arg6[%c0_7, %c0_8], %12 {strides = array<i32>} : memref<256x256xbf16, #tpu.memory_space<vmem>>, vector<256x256xbf16>,
    %c0_9 = arith.constant 0 : index
    %c0_10 = arith.constant 0 : index
    %14 = vector.load %arg4[%c0_9, %c0_10] : memref<32x256xbf16, #tpu.memory_space<vmem>>, vector<32x256xbf16>
    %cst_11 = arith.constant dense<0.000000e+00> : vector<256x256xf32>
    %15 = tpu.matmul %0, %14, %cst_11 {dimension_numbers = #tpu.dot_dimension_numbers<[1], [0], [0], [1], [0, 0, 1, 1], [], []>} : vector<256x32xbf16>, vector<32x256xbf16>, vector<256x256xf32> -> vector<256x256xf32>
    %c0_12 = arith.constant 0 : index
    %c0_13 = arith.constant 0 : index
    %16 = vector.load %arg5[%c0_12, %c0_13] : memref<1x256xbf16, #tpu.memory_space<vmem>>, vector<1x256xbf16>
    %17 = arith.extf %16 : vector<1x256xbf16> to vector<1x256xf32>
    %18 = vector.broadcast %17 : vector<1x256xf32> to vector<256x256xf32>
    %19 = arith.addf %15, %18 : vector<256x256xf32>
    %cst_14 = arith.constant 0.000000e+00 : f32
    %20 = vector.broadcast %cst_14 : f32 to vector<256x256xf32>
    %21 = arith.cmpf ogt, %19, %20 : vector<256x256xf32>
    %cst_15 = arith.constant 1.000000e-01 : f32
    %22 = vector.broadcast %cst_15 : f32 to vector<256x256xf32>
    %23 = arith.mulf %22, %19 : vector<256x256xf32>
    %24 = arith.select %21, %19, %23 : vector<256x256xi1>, vector<256x256xf32>
    %25 = arith.truncf %24 : vector<256x256xf32> to vector<256x256xbf16>
    %c0_16 = arith.constant 0 : index
    %c0_17 = arith.constant 0 : index
    %26 = vector.load %arg7[%c0_16, %c0_17] : memref<256x256xbf16, #tpu.memory_space<vmem>>, vector<256x256xbf16>
    tpu.vector_store %arg7[%c0_16, %c0_17], %25 {strides = array<i32>} : memref<256x256xbf16, #tpu.memory_space<vmem>>, vector<256x256xbf16>,
    return
  }
  func.func @transform_0(%arg0: i32) -> (i32, i32) {
    %c0_i32 = arith.constant 0 : i32
    %c0_i32_0 = arith.constant 0 : i32
    return %arg0, %c0_i32 : i32, i32
  }
  func.func @transform_1(%arg0: i32) -> (i32, i32) {
    %c0_i32 = arith.constant 0 : i32
    %c0_i32_0 = arith.constant 0 : i32
    %c0_i32_1 = arith.constant 0 : i32
    return %c0_i32, %c0_i32_0 : i32, i32
  }
  func.func @transform_2(%arg0: i32) -> (i32, i32) {
    %c0_i32 = arith.constant 0 : i32
    %c0_i32_0 = arith.constant 0 : i32
    %c0_i32_1 = arith.constant 0 : i32
    return %c0_i32, %c0_i32_0 : i32, i32
  }
  func.func @transform_3(%arg0: i32) -> (i32, i32) {
    %c0_i32 = arith.constant 0 : i32
    %c0_i32_0 = arith.constant 0 : i32
    %c0_i32_1 = arith.constant 0 : i32
    return %c0_i32, %c0_i32_0 : i32, i32
  }
  func.func @transform_4(%arg0: i32) -> (i32, i32) {
    %c0_i32 = arith.constant 0 : i32
    %c0_i32_0 = arith.constant 0 : i32
    %c0_i32_1 = arith.constant 0 : i32
    return %c0_i32, %c0_i32_0 : i32, i32
  }
  func.func @transform_5(%arg0: i32) -> (i32, i32) {
    %c0_i32 = arith.constant 0 : i32
    %c0_i32_0 = arith.constant 0 : i32
    return %arg0, %c0_i32 : i32, i32
  }
  func.func @transform_6(%arg0: i32) -> (i32, i32) {
    %c0_i32 = arith.constant 0 : i32
    %c0_i32_0 = arith.constant 0 : i32
    return %arg0, %c0_i32 : i32, i32
  }
}

</mosaic_0001>

<llo_original>
// kernel: tpu_custom_call.1
$region0: #{tpu_custom_call.1}
  #allocation0 [shape = 'u32[]', space=smem, size = 0x4, offset = 0x4, fixed_abs, tag = 'smem constant byte address 0x4 - core index']
  #allocation1 [shape = 'u32[72,128]{1,0:T(1,128)}', space=vmem, size = 0x9000, scoped, tag = 'internal scratch']
  %s0 = inlined_call_operand.vmem [shape: bf16[256,32], index: 0, kind: input, shape index: {}]
  %s1 = inlined_call_operand.vmem [shape: bf16[32,256], index: 1, kind: input, shape index: {}]
  %s2 = inlined_call_operand.vmem [shape: bf16[1,256], index: 2, kind: input, shape index: {}]
  %s3 = inlined_call_operand.vmem [shape: bf16[32,256], index: 3, kind: input, shape index: {}]
  %s4 = inlined_call_operand.vmem [shape: bf16[1,256], index: 4, kind: input, shape index: {}]
  %s5 = inlined_call_operand.hbm [shape: bf16[256,256], index: 5, kind: output, shape index: {0}]
  %s6 = inlined_call_operand.hbm [shape: bf16[256,256], index: 6, kind: output, shape index: {1}]
  %7 = xla_tuple %s5, %s6
  %s8 = sld [smem:[#allocation0]]
  $region38: #{tpu_custom_call.1} parent=0
    _
  %s10 = ssub.s32 1, %s8
  %s11 = scalar_select 0, %s10, %s8
  $region1: #{tpu_custom_call.1} parent=0
    #allocation2 [shape = 'u8[131072]{0}', space=vmem, size = 0x20000, scoped, tag = 'output window, operand 0, single buffered']
    #allocation3 [shape = 's32[1]{0}', space=sflag, size = 0x4, scoped, tag = 'scoped memory for tpu_custom_call.1']
    #allocation4 [shape = 'u8[131072]{0}', space=vmem, size = 0x20000, scoped, tag = 'output window, operand 1, single buffered']
    #allocation5 [shape = 's32[1]{0}', space=sflag, size = 0x4, scoped, tag = 'scoped memory for tpu_custom_call.1']
    %12 = vsyncpa [#allocation3], 0
    %13 = vsyncpa [#allocation5], 0
    // Predicated region
    $region2: #{tpu_custom_call.1} parent=1 // pred_check
      _
    $region3: #{tpu_custom_call.1} parent=1 // pred_check_branch
      %15 = sbr.rel (0) target = $region5
    $region4: #{tpu_custom_call.1} parent=1 // pred_region
      _
    $region5: #{tpu_custom_call.1} parent=1 // pred_fallthru
      _
    // Predicated region
    $region6: #{tpu_custom_call.1} parent=1 // pred_check
      _
    $region7: #{tpu_custom_call.1} parent=1 // pred_check_branch
      %17 = sbr.rel (0) target = $region9
    $region8: #{tpu_custom_call.1} parent=1 // pred_region
      _
    $region9: #{tpu_custom_call.1} parent=1 // pred_fallthru
      _
    // Predicated region
    $region10: #{tpu_custom_call.1} parent=1 // pred_check
      _
    $region11: #{tpu_custom_call.1} parent=1 // pred_check_branch
      %19 = sbr.rel (0) target = $region13
    $region12: #{tpu_custom_call.1} parent=1 // pred_region
      _
    $region13: #{tpu_custom_call.1} parent=1 // pred_fallthru
      _
    // Predicated region
    $region14: #{tpu_custom_call.1} parent=1 // pred_check
      _
    $region15: #{tpu_custom_call.1} parent=1 // pred_check_branch
      %21 = sbr.rel (0) target = $region17
    $region16: #{tpu_custom_call.1} parent=1 // pred_region
      _
    $region17: #{tpu_custom_call.1} parent=1 // pred_fallthru
      _
    // Predicated region
    $region18: #{tpu_custom_call.1} parent=1 // pred_check
      _
    $region19: #{tpu_custom_call.1} parent=1 // pred_check_branch
      %23 = sbr.rel (0) target = $region21
    $region20: #{tpu_custom_call.1} parent=1 // pred_region
      _
    $region21: #{tpu_custom_call.1} parent=1 // pred_fallthru
      _
    %v25 = vld [vmem:[%s0] sm:$0xf]
    %v26 = vld [vmem:[%s0 + $0x4] sm:$0xf]
    %v27 = vld [vmem:[%s0 + $0x8] sm:$0xf]
    %v28 = vld [vmem:[%s0 + $0xc] sm:$0xf]
    %v29 = vld [vmem:[%s0 + $0x10] sm:$0xf]
    %v30 = vld [vmem:[%s0 + $0x14] sm:$0xf]
    %v31 = vld [vmem:[%s0 + $0x18] sm:$0xf]
    %v32 = vld [vmem:[%s0 + $0x1c] sm:$0xf]
    %v33 = vld [vmem:[%s0 + $0x20] sm:$0xf]
    %v34 = vld [vmem:[%s0 + $0x24] sm:$0xf]
    %v35 = vld [vmem:[%s0 + $0x28] sm:$0xf]
    %v36 = vld [vmem:[%s0 + $0x2c] sm:$0xf]
    %v37 = vld [vmem:[%s0 + $0x30] sm:$0xf]
    %v38 = vld [vmem:[%s0 + $0x34] sm:$0xf]
    %v39 = vld [vmem:[%s0 + $0x38] sm:$0xf]
    %v40 = vld [vmem:[%s0 + $0x3c] sm:$0xf]
    %v41 = vld [vmem:[%s0 + $0x40] sm:$0xf]
    %v42 = vld [vmem:[%s0 + $0x44] sm:$0xf]
    %v43 = vld [vmem:[%s0 + $0x48] sm:$0xf]
    %v44 = vld [vmem:[%s0 + $0x4c] sm:$0xf]
    %v45 = vld [vmem:[%s0 + $0x50] sm:$0xf]
    %v46 = vld [vmem:[%s0 + $0x54] sm:$0xf]
    %v47 = vld [vmem:[%s0 + $0x58] sm:$0xf]
    %v48 = vld [vmem:[%s0 + $0x5c] sm:$0xf]
    %v49 = vld [vmem:[%s0 + $0x60] sm:$0xf]
    %v50 = vld [vmem:[%s0 + $0x64] sm:$0xf]
    %v51 = vld [vmem:[%s0 + $0x68] sm:$0xf]
    %v52 = vld [vmem:[%s0 + $0x6c] sm:$0xf]
    %v53 = vld [vmem:[%s0 + $0x70] sm:$0xf]
    %v54 = vld [vmem:[%s0 + $0x74] sm:$0xf]
    %v55 = vld [vmem:[%s0 + $0x78] sm:$0xf]
    %v56 = vld [vmem:[%s0 + $0x7c] sm:$0xf]
    %v57 = vld [vmem:[%s1] sm:$0xff]
    %v58 = vld [vmem:[%s1 + $0x8] sm:$0xff]
    %v59 = vld [vmem:[%s1 + $0x10] sm:$0xff]
    %v60 = vld [vmem:[%s1 + $0x18] sm:$0xff]
    %v61 = vld [vmem:[%s2] sm:$0x3]
    %v62 = vunpack.c.l.bf16 %v61
    %v64 = vperm.slane %v62, 0
    %v65 = vperm.slane %v62, 2
    %v68 = vperm.slane %v64, 0
    %v69 = vperm.slane %v65, 0
    %v102 = vunpack.c.l.b16 %v25
    %v103 = vunpack.c.l.b16 %v26
    %v104 = vunpack.c.l.b16 %v27
    %v105 = vunpack.c.l.b16 %v28
    %v106 = vunpack.c.l.b16 %v29
    %v107 = vunpack.c.l.b16 %v30
    %v108 = vunpack.c.l.b16 %v31
    %v109 = vunpack.c.l.b16 %v32
    %v110 = vunpack.c.l.b16 %v33
    %v111 = vunpack.c.l.b16 %v34
    %v112 = vunpack.c.l.b16 %v35
    %v113 = vunpack.c.l.b16 %v36
    %v114 = vunpack.c.l.b16 %v37
    %v115 = vunpack.c.l.b16 %v38
    %v116 = vunpack.c.l.b16 %v39
    %v117 = vunpack.c.l.b16 %v40
    %v118 = vunpack.c.l.b16 %v41
    %v119 = vunpack.c.l.b16 %v42
    %v120 = vunpack.c.l.b16 %v43
    %v121 = vunpack.c.l.b16 %v44
    %v122 = vunpack.c.l.b16 %v45
    %v123 = vunpack.c.l.b16 %v46
    %v124 = vunpack.c.l.b16 %v47
    %v125 = vunpack.c.l.b16 %v48
    %v126 = vunpack.c.l.b16 %v49
    %v127 = vunpack.c.l.b16 %v50
    %v128 = vunpack.c.l.b16 %v51
    %v129 = vunpack.c.l.b16 %v52
    %v130 = vunpack.c.l.b16 %v53
    %v131 = vunpack.c.l.b16 %v54
    %v132 = vunpack.c.l.b16 %v55
    %v133 = vunpack.c.l.b16 %v56
    %v134 = vpack.c.b16 %v103, %v102
    %v135 = vpack.c.b16 %v105, %v104
    %v136 = vpack.c.b16 %v107, %v106
    %v137 = vpack.c.b16 %v109, %v108
    %v138 = vpack.c.b16 %v111, %v110
    %v139 = vpack.c.b16 %v113, %v112
    %v140 = vpack.c.b16 %v115, %v114
    %v141 = vpack.c.b16 %v117, %v116
    %v142 = vpack.c.b16 %v119, %v118
    %v143 = vpack.c.b16 %v121, %v120
    %v144 = vpack.c.b16 %v123, %v122
    %v145 = vpack.c.b16 %v125, %v124
    %v146 = vpack.c.b16 %v127, %v126
    %v147 = vpack.c.b16 %v129, %v128
    %v148 = vpack.c.b16 %v131, %v130
    %v149 = vpack.c.b16 %v133, %v132
    %v154 = vunpack.c.l.b16 %v57
    %v155 = vunpack.c.h.b16 %v57
    %v156 = vunpack.c.l.b16 %v58
    %v157 = vunpack.c.h.b16 %v58
    %v158 = vunpack.c.l.b16 %v59
    %v159 = vunpack.c.h.b16 %v59
    %v160 = vunpack.c.l.b16 %v60
    %v161 = vunpack.c.h.b16 %v60
    %v162 = vpack.c.b16 %v156, %v154
    %v163 = vpack.c.b16 %v157, %v155
    %v164 = vpack.c.b16 %v160, %v158
    %v165 = vpack.c.b16 %v161, %v159
    %vm170 = vcmask 261120
    %v172 = vsel %vm170, %v134, 0
    %v175 = vsel %vm170, %v135, 0
    %v178 = vsel %vm170, %v136, 0
    %v181 = vsel %vm170, %v137, 0
    %v184 = vsel %vm170, %v138, 0
    %v187 = vsel %vm170, %v139, 0
    %v190 = vsel %vm170, %v140, 0
    %v193 = vsel %vm170, %v141, 0
    %v196 = vsel %vm170, %v142, 0
    %v199 = vsel %vm170, %v143, 0
    %v202 = vsel %vm170, %v144, 0
    %v205 = vsel %vm170, %v145, 0
    %v208 = vsel %vm170, %v146, 0
    %v211 = vsel %vm170, %v147, 0
    %v214 = vsel %vm170, %v148, 0
    %v217 = vsel %vm170, %v149, 0
    %219 = vmatpush.bf16.msra.mxu0 0
    %220 = vmatpush.bf16.msra.mxu0 0
    %221 = vmatpush.bf16.msra.mxu0 0
    %222 = vmatpush.bf16.msra.mxu0 0
    %223 = vmatpush.bf16.msra.mxu0 0
    %224 = vmatpush.bf16.msra.mxu0 0
    %225 = vmatpush.bf16.msra.mxu0 %v164
    %226 = vmatpush.bf16.msra.mxu0 %v162
    %227 = vmatmul.bf16.gmra.mxu0 %v172
    %v228 = vpop.f32.mrf.mxu0
    %v229 = vadd.f32 %v68, %v228
    %v230 = vpop.f32.mrf.mxu0
    %v231 = vadd.f32 %v68, %v230
    %232 = vmatmul.bf16.gmra.mxu0 %v175
    %v233 = vpop.f32.mrf.mxu0
    %v234 = vadd.f32 %v68, %v233
    %v235 = vpop.f32.mrf.mxu0
    %v236 = vadd.f32 %v68, %v235
    %237 = vmatmul.bf16.gmra.mxu0 %v178
    %v238 = vpop.f32.mrf.mxu0
    %v239 = vadd.f32 %v68, %v238
    %v240 = vpop.f32.mrf.mxu0
    %v241 = vadd.f32 %v68, %v240
    %242 = vmatmul.bf16.gmra.mxu0 %v181
    %v243 = vpop.f32.mrf.mxu0
    %v244 = vadd.f32 %v68, %v243
    %v245 = vpop.f32.mrf.mxu0
    %v246 = vadd.f32 %v68, %v245
    %247 = vmatmul.bf16.gmra.mxu0 %v184
    %v248 = vpop.f32.mrf.mxu0
    %v249 = vadd.f32 %v68, %v248
    %v250 = vpop.f32.mrf.mxu0
    %v251 = vadd.f32 %v68, %v250
    %252 = vmatmul.bf16.gmra.mxu0 %v187
    %v253 = vpop.f32.mrf.mxu0
    %v254 = vadd.f32 %v68, %v253
    %v255 = vpop.f32.mrf.mxu0
    %v256 = vadd.f32 %v68, %v255
    %257 = vmatmul.bf16.gmra.mxu0 %v190
    %v258 = vpop.f32.mrf.mxu0
    %v259 = vadd.f32 %v68, %v258
    %v260 = vpop.f32.mrf.mxu0
    %v261 = vadd.f32 %v68, %v260
    %262 = vmatmul.bf16.gmra.mxu0 %v193
    %v263 = vpop.f32.mrf.mxu0
    %v264 = vadd.f32 %v68, %v263
    %v265 = vpop.f32.mrf.mxu0
    %v266 = vadd.f32 %v68, %v265
    %267 = vmatmul.bf16.gmra.mxu0 %v196
    %v268 = vpop.f32.mrf.mxu0
    %v269 = vadd.f32 %v68, %v268
    %v270 = vpop.f32.mrf.mxu0
    %v271 = vadd.f32 %v68, %v270
    %272 = vmatmul.bf16.gmra.mxu0 %v199
    %v273 = vpop.f32.mrf.mxu0
    %v274 = vadd.f32 %v68, %v273
    %v275 = vpop.f32.mrf.mxu0
    %v276 = vadd.f32 %v68, %v275
    %277 = vmatmul.bf16.gmra.mxu0 %v202
    %v278 = vpop.f32.mrf.mxu0
    %v279 = vadd.f32 %v68, %v278
    %v280 = vpop.f32.mrf.mxu0
    %v281 = vadd.f32 %v68, %v280
    %282 = vmatmul.bf16.gmra.mxu0 %v205
    %v283 = vpop.f32.mrf.mxu0
    %v284 = vadd.f32 %v68, %v283
    %v285 = vpop.f32.mrf.mxu0
    %v286 = vadd.f32 %v68, %v285
    %287 = vmatmul.bf16.gmra.mxu0 %v208
    %v288 = vpop.f32.mrf.mxu0
    %v289 = vadd.f32 %v68, %v288
    %v290 = vpop.f32.mrf.mxu0
    %v291 = vadd.f32 %v68, %v290
    %292 = vmatmul.bf16.gmra.mxu0 %v211
    %v293 = vpop.f32.mrf.mxu0
    %v294 = vadd.f32 %v68, %v293
    %v295 = vpop.f32.mrf.mxu0
    %v296 = vadd.f32 %v68, %v295
    %297 = vmatmul.bf16.gmra.mxu0 %v214
    %v298 = vpop.f32.mrf.mxu0
    %v299 = vadd.f32 %v68, %v298
    %v300 = vpop.f32.mrf.mxu0
    %v301 = vadd.f32 %v68, %v300
    %302 = vmatmul.bf16.gmra.mxu0 %v217
    %v303 = vpop.f32.mrf.mxu0
    %v304 = vadd.f32 %v68, %v303
    %v305 = vpop.f32.mrf.mxu0
    %v306 = vadd.f32 %v68, %v305
    %307 = vdwg.mxu0
    %308 = vmatpush.bf16.msra.mxu0 0
    %309 = vmatpush.bf16.msra.mxu0 0
    %310 = vmatpush.bf16.msra.mxu0 0
    %311 = vmatpush.bf16.msra.mxu0 0
    %312 = vmatpush.bf16.msra.mxu0 0
    %313 = vmatpush.bf16.msra.mxu0 0
    %314 = vmatpush.bf16.msra.mxu0 %v165
    %315 = vmatpush.bf16.msra.mxu0 %v163
    %316 = vmatmul.bf16.gmra.mxu0 %v172
    %v317 = vpop.f32.mrf.mxu0
    %v318 = vadd.f32 %v69, %v317
    %v319 = vpop.f32.mrf.mxu0
    %v320 = vadd.f32 %v69, %v319
    %321 = vmatmul.bf16.gmra.mxu0 %v175
    %v322 = vpop.f32.mrf.mxu0
    %v323 = vadd.f32 %v69, %v322
    %v324 = vpop.f32.mrf.mxu0
    %v325 = vadd.f32 %v69, %v324
    %326 = vmatmul.bf16.gmra.mxu0 %v178
    %v327 = vpop.f32.mrf.mxu0
    %v328 = vadd.f32 %v69, %v327
    %v329 = vpop.f32.mrf.mxu0
    %v330 = vadd.f32 %v69, %v329
    %331 = vmatmul.bf16.gmra.mxu0 %v181
    %v332 = vpop.f32.mrf.mxu0
    %v333 = vadd.f32 %v69, %v332
    %v334 = vpop.f32.mrf.mxu0
    %v335 = vadd.f32 %v69, %v334
    %336 = vmatmul.bf16.gmra.mxu0 %v184
    %v337 = vpop.f32.mrf.mxu0
    %v338 = vadd.f32 %v69, %v337
    %v339 = vpop.f32.mrf.mxu0
    %v340 = vadd.f32 %v69, %v339
    %341 = vmatmul.bf16.gmra.mxu0 %v187
    %v342 = vpop.f32.mrf.mxu0
    %v343 = vadd.f32 %v69, %v342
    %v344 = vpop.f32.mrf.mxu0
    %v345 = vadd.f32 %v69, %v344
    %346 = vmatmul.bf16.gmra.mxu0 %v190
    %v347 = vpop.f32.mrf.mxu0
    %v348 = vadd.f32 %v69, %v347
    %v349 = vpop.f32.mrf.mxu0
    %v350 = vadd.f32 %v69, %v349
    %351 = vmatmul.bf16.gmra.mxu0 %v193
    %v352 = vpop.f32.mrf.mxu0
    %v353 = vadd.f32 %v69, %v352
    %v354 = vpop.f32.mrf.mxu0
    %v355 = vadd.f32 %v69, %v354
    %356 = vmatmul.bf16.gmra.mxu0 %v196
    %v357 = vpop.f32.mrf.mxu0
    %v358 = vadd.f32 %v69, %v357
    %v359 = vpop.f32.mrf.mxu0
    %v360 = vadd.f32 %v69, %v359
    %361 = vmatmul.bf16.gmra.mxu0 %v199
    %v362 = vpop.f32.mrf.mxu0
    %v363 = vadd.f32 %v69, %v362
    %v364 = vpop.f32.mrf.mxu0
    %v365 = vadd.f32 %v69, %v364
    %366 = vmatmul.bf16.gmra.mxu0 %v202
    %v367 = vpop.f32.mrf.mxu0
    %v368 = vadd.f32 %v69, %v367
    %v369 = vpop.f32.mrf.mxu0
    %v370 = vadd.f32 %v69, %v369
    %371 = vmatmul.bf16.gmra.mxu0 %v205
    %v372 = vpop.f32.mrf.mxu0
    %v373 = vadd.f32 %v69, %v372
    %v374 = vpop.f32.mrf.mxu0
    %v375 = vadd.f32 %v69, %v374
    %376 = vmatmul.bf16.gmra.mxu0 %v208
    %v377 = vpop.f32.mrf.mxu0
    %v378 = vadd.f32 %v69, %v377
    %v379 = vpop.f32.mrf.mxu0
    %v380 = vadd.f32 %v69, %v379
    %381 = vmatmul.bf16.gmra.mxu0 %v211
    %v382 = vpop.f32.mrf.mxu0
    %v383 = vadd.f32 %v69, %v382
    %v384 = vpop.f32.mrf.mxu0
    %v385 = vadd.f32 %v69, %v384
    %386 = vmatmul.bf16.gmra.mxu0 %v214
    %v387 = vpop.f32.mrf.mxu0
    %v388 = vadd.f32 %v69, %v387
    %v389 = vpop.f32.mrf.mxu0
    %v390 = vadd.f32 %v69, %v389
    %391 = vmatmul.bf16.gmra.mxu0 %v217
    %v392 = vpop.f32.mrf.mxu0
    %v393 = vadd.f32 %v69, %v392
    %v394 = vpop.f32.mrf.mxu0
    %v395 = vadd.f32 %v69, %v394
    %396 = vdwg.mxu0
    %vm397 = vcmp.gt.f32.partialorder %v229, 0.0
    %vm398 = vcmp.gt.f32.partialorder %v318, 0.0
    %vm399 = vcmp.gt.f32.partialorder %v231, 0.0
    %vm400 = vcmp.gt.f32.partialorder %v320, 0.0
    %vm401 = vcmp.gt.f32.partialorder %v234, 0.0
    %vm402 = vcmp.gt.f32.partialorder %v323, 0.0
    %vm403 = vcmp.gt.f32.partialorder %v236, 0.0
    %vm404 = vcmp.gt.f32.partialorder %v325, 0.0
    %vm405 = vcmp.gt.f32.partialorder %v239, 0.0
    %vm406 = vcmp.gt.f32.partialorder %v328, 0.0
    %vm407 = vcmp.gt.f32.partialorder %v241, 0.0
    %vm408 = vcmp.gt.f32.partialorder %v330, 0.0
    %vm409 = vcmp.gt.f32.partialorder %v244, 0.0
    %vm410 = vcmp.gt.f32.partialorder %v333, 0.0
    %vm411 = vcmp.gt.f32.partialorder %v246, 0.0
    %vm412 = vcmp.gt.f32.partialorder %v335, 0.0
    %vm413 = vcmp.gt.f32.partialorder %v249, 0.0
    %vm414 = vcmp.gt.f32.partialorder %v338, 0.0
    %vm415 = vcmp.gt.f32.partialorder %v251, 0.0
    %vm416 = vcmp.gt.f32.partialorder %v340, 0.0
    %vm417 = vcmp.gt.f32.partialorder %v254, 0.0
    %vm418 = vcmp.gt.f32.partialorder %v343, 0.0
    %vm419 = vcmp.gt.f32.partialorder %v256, 0.0
    %vm420 = vcmp.gt.f32.partialorder %v345, 0.0
    %vm421 = vcmp.gt.f32.partialorder %v259, 0.0
    %vm422 = vcmp.gt.f32.partialorder %v348, 0.0
    %vm423 = vcmp.gt.f32.partialorder %v261, 0.0
    %vm424 = vcmp.gt.f32.partialorder %v350, 0.0
    %vm425 = vcmp.gt.f32.partialorder %v264, 0.0
    %vm426 = vcmp.gt.f32.partialorder %v353, 0.0
    %vm427 = vcmp.gt.f32.partialorder %v266, 0.0
    %vm428 = vcmp.gt.f32.partialorder %v355, 0.0
    %vm429 = vcmp.gt.f32.partialorder %v269, 0.0
    %vm430 = vcmp.gt.f32.partialorder %v358, 0.0
    %vm431 = vcmp.gt.f32.partialorder %v271, 0.0
    %vm432 = vcmp.gt.f32.partialorder %v360, 0.0
    %vm433 = vcmp.gt.f32.partialorder %v274, 0.0
    %vm434 = vcmp.gt.f32.partialorder %v363, 0.0
    %vm435 = vcmp.gt.f32.partialorder %v276, 0.0
    %vm436 = vcmp.gt.f32.partialorder %v365, 0.0
    %vm437 = vcmp.gt.f32.partialorder %v279, 0.0
    %vm438 = vcmp.gt.f32.partialorder %v368, 0.0
    %vm439 = vcmp.gt.f32.partialorder %v281, 0.0
    %vm440 = vcmp.gt.f32.partialorder %v370, 0.0
    %vm441 = vcmp.gt.f32.partialorder %v284, 0.0
    %vm442 = vcmp.gt.f32.partialorder %v373, 0.0
    %vm443 = vcmp.gt.f32.partialorder %v286, 0.0
    %vm444 = vcmp.gt.f32.partialorder %v375, 0.0
    %vm445 = vcmp.gt.f32.partialorder %v289, 0.0
    %vm446 = vcmp.gt.f32.partialorder %v378, 0.0
    %vm447 = vcmp.gt.f32.partialorder %v291, 0.0
    %vm448 = vcmp.gt.f32.partialorder %v380, 0.0
    %vm449 = vcmp.gt.f32.partialorder %v294, 0.0
    %vm450 = vcmp.gt.f32.partialorder %v383, 0.0
    %vm451 = vcmp.gt.f32.partialorder %v296, 0.0
    %vm452 = vcmp.gt.f32.partialorder %v385, 0.0
    %vm453 = vcmp.gt.f32.partialorder %v299, 0.0
    %vm454 = vcmp.gt.f32.partialorder %v388, 0.0
    %vm455 = vcmp.gt.f32.partialorder %v301, 0.0
    %vm456 = vcmp.gt.f32.partialorder %v390, 0.0
    %vm457 = vcmp.gt.f32.partialorder %v304, 0.0
    %vm458 = vcmp.gt.f32.partialorder %v393, 0.0
    %vm459 = vcmp.gt.f32.partialorder %v306, 0.0
    %vm460 = vcmp.gt.f32.partialorder %v395, 0.0
    %v461 = vmul.f32 %v229, 0.1
    %v462 = vmul.f32 %v318, 0.1
    %v463 = vmul.f32 %v231, 0.1
    %v464 = vmul.f32 %v320, 0.1
    %v465 = vmul.f32 %v234, 0.1
    %v466 = vmul.f32 %v323, 0.1
    %v467 = vmul.f32 %v236, 0.1
    %v468 = vmul.f32 %v325, 0.1
    %v469 = vmul.f32 %v239, 0.1
    %v470 = vmul.f32 %v328, 0.1
    %v471 = vmul.f32 %v241, 0.1
    %v472 = vmul.f32 %v330, 0.1
    %v473 = vmul.f32 %v244, 0.1
    %v474 = vmul.f32 %v333, 0.1
    %v475 = vmul.f32 %v246, 0.1
    %v476 = vmul.f32 %v335, 0.1
    %v477 = vmul.f32 %v249, 0.1
    %v478 = vmul.f32 %v338, 0.1
    %v479 = vmul.f32 %v251, 0.1
    %v480 = vmul.f32 %v340, 0.1
    %v481 = vmul.f32 %v254, 0.1
    %v482 = vmul.f32 %v343, 0.1
    %v483 = vmul.f32 %v256, 0.1
    %v484 = vmul.f32 %v345, 0.1
    %v485 = vmul.f32 %v259, 0.1
    %v486 = vmul.f32 %v348, 0.1
    %v487 = vmul.f32 %v261, 0.1
    %v488 = vmul.f32 %v350, 0.1
    %v489 = vmul.f32 %v264, 0.1
    %v490 = vmul.f32 %v353, 0.1
    %v491 = vmul.f32 %v266, 0.1
    %v492 = vmul.f32 %v355, 0.1
    %v493 = vmul.f32 %v269, 0.1
    %v494 = vmul.f32 %v358, 0.1
    %v495 = vmul.f32 %v271, 0.1
    %v496 = vmul.f32 %v360, 0.1
    %v497 = vmul.f32 %v274, 0.1
    %v498 = vmul.f32 %v363, 0.1
    %v499 = vmul.f32 %v276, 0.1
    %v500 = vmul.f32 %v365, 0.1
    %v501 = vmul.f32 %v279, 0.1
    %v502 = vmul.f32 %v368, 0.1
    %v503 = vmul.f32 %v281, 0.1
    %v504 = vmul.f32 %v370, 0.1
    %v505 = vmul.f32 %v284, 0.1
    %v506 = vmul.f32 %v373, 0.1
    %v507 = vmul.f32 %v286, 0.1
    %v508 = vmul.f32 %v375, 0.1
    %v509 = vmul.f32 %v289, 0.1
    %v510 = vmul.f32 %v378, 0.1
    %v511 = vmul.f32 %v291, 0.1
    %v512 = vmul.f32 %v380, 0.1
    %v513 = vmul.f32 %v294, 0.1
    %v514 = vmul.f32 %v383, 0.1
    %v515 = vmul.f32 %v296, 0.1
    %v516 = vmul.f32 %v385, 0.1
    %v517 = vmul.f32 %v299, 0.1
    %v518 = vmul.f32 %v388, 0.1
    %v519 = vmul.f32 %v301, 0.1
    %v520 = vmul.f32 %v390, 0.1
    %v521 = vmul.f32 %v304, 0.1
    %v522 = vmul.f32 %v393, 0.1
    %v523 = vmul.f32 %v306, 0.1
    %v524 = vmul.f32 %v395, 0.1
    %v525 = vsel %vm397, %v229, %v461
    %v526 = vsel %vm398, %v318, %v462
    %v527 = vsel %vm399, %v231, %v463
    %v528 = vsel %vm400, %v320, %v464
    %v529 = vsel %vm401, %v234, %v465
    %v530 = vsel %vm402, %v323, %v466
    %v531 = vsel %vm403, %v236, %v467
    %v532 = vsel %vm404, %v325, %v468
    %v533 = vsel %vm405, %v239, %v469
    %v534 = vsel %vm406, %v328, %v470
    %v535 = vsel %vm407, %v241, %v471
    %v536 = vsel %vm408, %v330, %v472
    %v537 = vsel %vm409, %v244, %v473
    %v538 = vsel %vm410, %v333, %v474
    %v539 = vsel %vm411, %v246, %v475
    %v540 = vsel %vm412, %v335, %v476
    %v541 = vsel %vm413, %v249, %v477
    %v542 = vsel %vm414, %v338, %v478
    %v543 = vsel %vm415, %v251, %v479
    %v544 = vsel %vm416, %v340, %v480
    %v545 = vsel %vm417, %v254, %v481
    %v546 = vsel %vm418, %v343, %v482
    %v547 = vsel %vm419, %v256, %v483
    %v548 = vsel %vm420, %v345, %v484
    %v549 = vsel %vm421, %v259, %v485
    %v550 = vsel %vm422, %v348, %v486
    %v551 = vsel %vm423, %v261, %v487
    %v552 = vsel %vm424, %v350, %v488
    %v553 = vsel %vm425, %v264, %v489
    %v554 = vsel %vm426, %v353, %v490
    %v555 = vsel %vm427, %v266, %v491
    %v556 = vsel %vm428, %v355, %v492
    %v557 = vsel %vm429, %v269, %v493
    %v558 = vsel %vm430, %v358, %v494
    %v559 = vsel %vm431, %v271, %v495
    %v560 = vsel %vm432, %v360, %v496
    %v561 = vsel %vm433, %v274, %v497
    %v562 = vsel %vm434, %v363, %v498
    %v563 = vsel %vm435, %v276, %v499
    %v564 = vsel %vm436, %v365, %v500
    %v565 = vsel %vm437, %v279, %v501
    %v566 = vsel %vm438, %v368, %v502
    %v567 = vsel %vm439, %v281, %v503
    %v568 = vsel %vm440, %v370, %v504
    %v569 = vsel %vm441, %v284, %v505
    %v570 = vsel %vm442, %v373, %v506
    %v571 = vsel %vm443, %v286, %v507
    %v572 = vsel %vm444, %v375, %v508
    %v573 = vsel %vm445, %v289, %v509
    %v574 = vsel %vm446, %v378, %v510
    %v575 = vsel %vm447, %v291, %v511
    %v576 = vsel %vm448, %v380, %v512
    %v577 = vsel %vm449, %v294, %v513
    %v578 = vsel %vm450, %v383, %v514
    %v579 = vsel %vm451, %v296, %v515
    %v580 = vsel %vm452, %v385, %v516
    %v581 = vsel %vm453, %v299, %v517
    %v582 = vsel %vm454, %v388, %v518
    %v583 = vsel %vm455, %v301, %v519
    %v584 = vsel %vm456, %v390, %v520
    %v585 = vsel %vm457, %v304, %v521
    %v586 = vsel %vm458, %v393, %v522
    %v587 = vsel %vm459, %v306, %v523
    %v588 = vsel %vm460, %v395, %v524
    %v589 = vpack.c.bf16 %v526, %v525
    %v590 = vpack.c.bf16 %v528, %v527
    %v591 = vpack.c.bf16 %v530, %v529
    %v592 = vpack.c.bf16 %v532, %v531
    %v593 = vpack.c.bf16 %v534, %v533
    %v594 = vpack.c.bf16 %v536, %v535
    %v595 = vpack.c.bf16 %v538, %v537
    %v596 = vpack.c.bf16 %v540, %v539
    %v597 = vpack.c.bf16 %v542, %v541
    %v598 = vpack.c.bf16 %v544, %v543
    %v599 = vpack.c.bf16 %v546, %v545
    %v600 = vpack.c.bf16 %v548, %v547
    %v601 = vpack.c.bf16 %v550, %v549
    %v602 = vpack.c.bf16 %v552, %v551
    %v603 = vpack.c.bf16 %v554, %v553
    %v604 = vpack.c.bf16 %v556, %v555
    %v605 = vpack.c.bf16 %v558, %v557
    %v606 = vpack.c.bf16 %v560, %v559
    %v607 = vpack.c.bf16 %v562, %v561
    %v608 = vpack.c.bf16 %v564, %v563
    %v609 = vpack.c.bf16 %v566, %v565
    %v610 = vpack.c.bf16 %v568, %v567
    %v611 = vpack.c.bf16 %v570, %v569
    %v612 = vpack.c.bf16 %v572, %v571
    %v613 = vpack.c.bf16 %v574, %v573
    %v614 = vpack.c.bf16 %v576, %v575
    %v615 = vpack.c.bf16 %v578, %v577
    %v616 = vpack.c.bf16 %v580, %v579
    %v617 = vpack.c.bf16 %v582, %v581
    %v618 = vpack.c.bf16 %v584, %v583
    %v619 = vpack.c.bf16 %v586, %v585
    %v620 = vpack.c.bf16 %v588, %v587
    %621 = vst [vmem:[#allocation2] sm:$0xff] %v589
    %622 = vst [vmem:[#allocation2 + $0x8] sm:$0xff] %v590
    %623 = vst [vmem:[#allocation2 + $0x10] sm:$0xff] %v591
    %624 = vst [vmem:[#allocation2 + $0x18] sm:$0xff] %v592
    %625 = vst [vmem:[#allocation2 + $0x20] sm:$0xff] %v593
    %626 = vst [vmem:[#allocation2 + $0x28] sm:$0xff] %v594
    %627 = vst [vmem:[#allocation2 + $0x30] sm:$0xff] %v595
    %628 = vst [vmem:[#allocation2 + $0x38] sm:$0xff] %v596
    %629 = vst [vmem:[#allocation2 + $0x40] sm:$0xff] %v597
    %630 = vst [vmem:[#allocation2 + $0x48] sm:$0xff] %v598
    %631 = vst [vmem:[#allocation2 + $0x50] sm:$0xff] %v599
    %632 = vst [vmem:[#allocation2 + $0x58] sm:$0xff] %v600
    %633 = vst [vmem:[#allocation2 + $0x60] sm:$0xff] %v601
    %634 = vst [vmem:[#allocation2 + $0x68] sm:$0xff] %v602
    %635 = vst [vmem:[#allocation2 + $0x70] sm:$0xff] %v603
    %636 = vst [vmem:[#allocation2 + $0x78] sm:$0xff] %v604
    %637 = vst [vmem:[#allocation2 + $0x80] sm:$0xff] %v605
    %638 = vst [vmem:[#allocation2 + $0x88] sm:$0xff] %v606
    %639 = vst [vmem:[#allocation2 + $0x90] sm:$0xff] %v607
    %640 = vst [vmem:[#allocation2 + $0x98] sm:$0xff] %v608
    %641 = vst [vmem:[#allocation2 + $0xa0] sm:$0xff] %v609
    %642 = vst [vmem:[#allocation2 + $0xa8] sm:$0xff] %v610
    %643 = vst [vmem:[#allocation2 + $0xb0] sm:$0xff] %v611
    %644 = vst [vmem:[#allocation2 + $0xb8] sm:$0xff] %v612
    %645 = vst [vmem:[#allocation2 + $0xc0] sm:$0xff] %v613
    %646 = vst [vmem:[#allocation2 + $0xc8] sm:$0xff] %v614
    %647 = vst [vmem:[#allocation2 + $0xd0] sm:$0xff] %v615
    %648 = vst [vmem:[#allocation2 + $0xd8] sm:$0xff] %v616
    %649 = vst [vmem:[#allocation2 + $0xe0] sm:$0xff] %v617
    %650 = vst [vmem:[#allocation2 + $0xe8] sm:$0xff] %v618
    %651 = vst [vmem:[#allocation2 + $0xf0] sm:$0xff] %v619
    %652 = vst [vmem:[#allocation2 + $0xf8] sm:$0xff] %v620
    %v653 = vld [vmem:[%s3] sm:$0xff]
    %v654 = vld [vmem:[%s3 + $0x8] sm:$0xff]
    %v655 = vld [vmem:[%s3 + $0x10] sm:$0xff]
    %v656 = vld [vmem:[%s3 + $0x18] sm:$0xff]
    %v657 = vld [vmem:[%s4] sm:$0x3]
    %v658 = vunpack.c.l.bf16 %v657
    %v660 = vperm.slane %v658, 0
    %v661 = vperm.slane %v658, 2
    %v664 = vperm.slane %v660, 0
    %v665 = vperm.slane %v661, 0
    %v670 = vunpack.c.l.b16 %v653
    %v671 = vunpack.c.h.b16 %v653
    %v672 = vunpack.c.l.b16 %v654
    %v673 = vunpack.c.h.b16 %v654
    %v674 = vunpack.c.l.b16 %v655
    %v675 = vunpack.c.h.b16 %v655
    %v676 = vunpack.c.l.b16 %v656
    %v677 = vunpack.c.h.b16 %v656
    %v678 = vpack.c.b16 %v672, %v670
    %v679 = vpack.c.b16 %v673, %v671
    %v680 = vpack.c.b16 %v676, %v674
    %v681 = vpack.c.b16 %v677, %v675
    %686 = vmatpush.bf16.msra.mxu0 0
    %687 = vmatpush.bf16.msra.mxu0 0
    %688 = vmatpush.bf16.msra.mxu0 0
    %689 = vmatpush.bf16.msra.mxu0 0
    %690 = vmatpush.bf16.msra.mxu0 0
    %691 = vmatpush.bf16.msra.mxu0 0
    %692 = vmatpush.bf16.msra.mxu0 %v680
    %693 = vmatpush.bf16.msra.mxu0 %v678
    %694 = vmatmul.bf16.gmra.mxu0 %v172
    %v695 = vpop.f32.mrf.mxu0
    %v696 = vadd.f32 %v664, %v695
    %v697 = vpop.f32.mrf.mxu0
    %v698 = vadd.f32 %v664, %v697
    %699 = vmatmul.bf16.gmra.mxu0 %v175
    %v700 = vpop.f32.mrf.mxu0
    %v701 = vadd.f32 %v664, %v700
    %v702 = vpop.f32.mrf.mxu0
    %v703 = vadd.f32 %v664, %v702
    %704 = vmatmul.bf16.gmra.mxu0 %v178
    %v705 = vpop.f32.mrf.mxu0
    %v706 = vadd.f32 %v664, %v705
    %v707 = vpop.f32.mrf.mxu0
    %v708 = vadd.f32 %v664, %v707
    %709 = vmatmul.bf16.gmra.mxu0 %v181
    %v710 = vpop.f32.mrf.mxu0
    %v711 = vadd.f32 %v664, %v710
    %v712 = vpop.f32.mrf.mxu0
    %v713 = vadd.f32 %v664, %v712
    %714 = vmatmul.bf16.gmra.mxu0 %v184
    %v715 = vpop.f32.mrf.mxu0
    %v716 = vadd.f32 %v664, %v715
    %v717 = vpop.f32.mrf.mxu0
    %v718 = vadd.f32 %v664, %v717
    %719 = vmatmul.bf16.gmra.mxu0 %v187
    %v720 = vpop.f32.mrf.mxu0
    %v721 = vadd.f32 %v664, %v720
    %v722 = vpop.f32.mrf.mxu0
    %v723 = vadd.f32 %v664, %v722
    %724 = vmatmul.bf16.gmra.mxu0 %v190
    %v725 = vpop.f32.mrf.mxu0
    %v726 = vadd.f32 %v664, %v725
    %v727 = vpop.f32.mrf.mxu0
    %v728 = vadd.f32 %v664, %v727
    %729 = vmatmul.bf16.gmra.mxu0 %v193
    %v730 = vpop.f32.mrf.mxu0
    %v731 = vadd.f32 %v664, %v730
    %v732 = vpop.f32.mrf.mxu0
    %v733 = vadd.f32 %v664, %v732
    %734 = vmatmul.bf16.gmra.mxu0 %v196
    %v735 = vpop.f32.mrf.mxu0
    %v736 = vadd.f32 %v664, %v735
    %v737 = vpop.f32.mrf.mxu0
    %v738 = vadd.f32 %v664, %v737
    %739 = vmatmul.bf16.gmra.mxu0 %v199
    %v740 = vpop.f32.mrf.mxu0
    %v741 = vadd.f32 %v664, %v740
    %v742 = vpop.f32.mrf.mxu0
    %v743 = vadd.f32 %v664, %v742
    %744 = vmatmul.bf16.gmra.mxu0 %v202
    %v745 = vpop.f32.mrf.mxu0
    %v746 = vadd.f32 %v664, %v745
    %v747 = vpop.f32.mrf.mxu0
    %v748 = vadd.f32 %v664, %v747
    %749 = vmatmul.bf16.gmra.mxu0 %v205
    %v750 = vpop.f32.mrf.mxu0
    %v751 = vadd.f32 %v664, %v750
    %v752 = vpop.f32.mrf.mxu0
    %v753 = vadd.f32 %v664, %v752
    %754 = vmatmul.bf16.gmra.mxu0 %v208
    %v755 = vpop.f32.mrf.mxu0
    %v756 = vadd.f32 %v664, %v755
    %v757 = vpop.f32.mrf.mxu0
    %v758 = vadd.f32 %v664, %v757
    %759 = vmatmul.bf16.gmra.mxu0 %v211
    %v760 = vpop.f32.mrf.mxu0
    %v761 = vadd.f32 %v664, %v760
    %v762 = vpop.f32.mrf.mxu0
    %v763 = vadd.f32 %v664, %v762
    %764 = vmatmul.bf16.gmra.mxu0 %v214
    %v765 = vpop.f32.mrf.mxu0
    %v766 = vadd.f32 %v664, %v765
    %v767 = vpop.f32.mrf.mxu0
    %v768 = vadd.f32 %v664, %v767
    %769 = vmatmul.bf16.gmra.mxu0 %v217
    %v770 = vpop.f32.mrf.mxu0
    %v771 = vadd.f32 %v664, %v770
    %v772 = vpop.f32.mrf.mxu0
    %v773 = vadd.f32 %v664, %v772
    %774 = vdwg.mxu0
    %775 = vmatpush.bf16.msra.mxu0 0
    %776 = vmatpush.bf16.msra.mxu0 0
    %777 = vmatpush.bf16.msra.mxu0 0
    %778 = vmatpush.bf16.msra.mxu0 0
    %779 = vmatpush.bf16.msra.mxu0 0
    %780 = vmatpush.bf16.msra.mxu0 0
    %781 = vmatpush.bf16.msra.mxu0 %v681
    %782 = vmatpush.bf16.msra.mxu0 %v679
    %783 = vmatmul.bf16.gmra.mxu0 %v172
    %v784 = vpop.f32.mrf.mxu0
    %v785 = vadd.f32 %v665, %v784
    %v786 = vpop.f32.mrf.mxu0
    %v787 = vadd.f32 %v665, %v786
    %788 = vmatmul.bf16.gmra.mxu0 %v175
    %v789 = vpop.f32.mrf.mxu0
    %v790 = vadd.f32 %v665, %v789
    %v791 = vpop.f32.mrf.mxu0
    %v792 = vadd.f32 %v665, %v791
    %793 = vmatmul.bf16.gmra.mxu0 %v178
    %v794 = vpop.f32.mrf.mxu0
    %v795 = vadd.f32 %v665, %v794
    %v796 = vpop.f32.mrf.mxu0
    %v797 = vadd.f32 %v665, %v796
    %798 = vmatmul.bf16.gmra.mxu0 %v181
    %v799 = vpop.f32.mrf.mxu0
    %v800 = vadd.f32 %v665, %v799
    %v801 = vpop.f32.mrf.mxu0
    %v802 = vadd.f32 %v665, %v801
    %803 = vmatmul.bf16.gmra.mxu0 %v184
    %v804 = vpop.f32.mrf.mxu0
    %v805 = vadd.f32 %v665, %v804
    %v806 = vpop.f32.mrf.mxu0
    %v807 = vadd.f32 %v665, %v806
    %808 = vmatmul.bf16.gmra.mxu0 %v187
    %v809 = vpop.f32.mrf.mxu0
    %v810 = vadd.f32 %v665, %v809
    %v811 = vpop.f32.mrf.mxu0
    %v812 = vadd.f32 %v665, %v811
    %813 = vmatmul.bf16.gmra.mxu0 %v190
    %v814 = vpop.f32.mrf.mxu0
    %v815 = vadd.f32 %v665, %v814
    %v816 = vpop.f32.mrf.mxu0
    %v817 = vadd.f32 %v665, %v816
    %818 = vmatmul.bf16.gmra.mxu0 %v193
    %v819 = vpop.f32.mrf.mxu0
    %v820 = vadd.f32 %v665, %v819
    %v821 = vpop.f32.mrf.mxu0
    %v822 = vadd.f32 %v665, %v821
    %823 = vmatmul.bf16.gmra.mxu0 %v196
    %v824 = vpop.f32.mrf.mxu0
    %v825 = vadd.f32 %v665, %v824
    %v826 = vpop.f32.mrf.mxu0
    %v827 = vadd.f32 %v665, %v826
    %828 = vmatmul.bf16.gmra.mxu0 %v199
    %v829 = vpop.f32.mrf.mxu0
    %v830 = vadd.f32 %v665, %v829
    %v831 = vpop.f32.mrf.mxu0
    %v832 = vadd.f32 %v665, %v831
    %833 = vmatmul.bf16.gmra.mxu0 %v202
    %v834 = vpop.f32.mrf.mxu0
    %v835 = vadd.f32 %v665, %v834
    %v836 = vpop.f32.mrf.mxu0
    %v837 = vadd.f32 %v665, %v836
    %838 = vmatmul.bf16.gmra.mxu0 %v205
    %v839 = vpop.f32.mrf.mxu0
    %v840 = vadd.f32 %v665, %v839
    %v841 = vpop.f32.mrf.mxu0
    %v842 = vadd.f32 %v665, %v841
    %843 = vmatmul.bf16.gmra.mxu0 %v208
    %v844 = vpop.f32.mrf.mxu0
    %v845 = vadd.f32 %v665, %v844
    %v846 = vpop.f32.mrf.mxu0
    %v847 = vadd.f32 %v665, %v846
    %848 = vmatmul.bf16.gmra.mxu0 %v211
    %v849 = vpop.f32.mrf.mxu0
    %v850 = vadd.f32 %v665, %v849
    %v851 = vpop.f32.mrf.mxu0
    %v852 = vadd.f32 %v665, %v851
    %853 = vmatmul.bf16.gmra.mxu0 %v214
    %v854 = vpop.f32.mrf.mxu0
    %v855 = vadd.f32 %v665, %v854
    %v856 = vpop.f32.mrf.mxu0
    %v857 = vadd.f32 %v665, %v856
    %858 = vmatmul.bf16.gmra.mxu0 %v217
    %v859 = vpop.f32.mrf.mxu0
    %v860 = vadd.f32 %v665, %v859
    %v861 = vpop.f32.mrf.mxu0
    %v862 = vadd.f32 %v665, %v861
    %863 = vdwg.mxu0
    %vm864 = vcmp.gt.f32.partialorder %v696, 0.0
    %vm865 = vcmp.gt.f32.partialorder %v785, 0.0
    %vm866 = vcmp.gt.f32.partialorder %v698, 0.0
    %vm867 = vcmp.gt.f32.partialorder %v787, 0.0
    %vm868 = vcmp.gt.f32.partialorder %v701, 0.0
    %vm869 = vcmp.gt.f32.partialorder %v790, 0.0
    %vm870 = vcmp.gt.f32.partialorder %v703, 0.0
    %vm871 = vcmp.gt.f32.partialorder %v792, 0.0
    %vm872 = vcmp.gt.f32.partialorder %v706, 0.0
    %vm873 = vcmp.gt.f32.partialorder %v795, 0.0
    %vm874 = vcmp.gt.f32.partialorder %v708, 0.0
    %vm875 = vcmp.gt.f32.partialorder %v797, 0.0
    %vm876 = vcmp.gt.f32.partialorder %v711, 0.0
    %vm877 = vcmp.gt.f32.partialorder %v800, 0.0
    %vm878 = vcmp.gt.f32.partialorder %v713, 0.0
    %vm879 = vcmp.gt.f32.partialorder %v802, 0.0
    %vm880 = vcmp.gt.f32.partialorder %v716, 0.0
    %vm881 = vcmp.gt.f32.partialorder %v805, 0.0
    %vm882 = vcmp.gt.f32.partialorder %v718, 0.0
    %vm883 = vcmp.gt.f32.partialorder %v807, 0.0
    %vm884 = vcmp.gt.f32.partialorder %v721, 0.0
    %vm885 = vcmp.gt.f32.partialorder %v810, 0.0
    %vm886 = vcmp.gt.f32.partialorder %v723, 0.0
    %vm887 = vcmp.gt.f32.partialorder %v812, 0.0
    %vm888 = vcmp.gt.f32.partialorder %v726, 0.0
    %vm889 = vcmp.gt.f32.partialorder %v815, 0.0
    %vm890 = vcmp.gt.f32.partialorder %v728, 0.0
    %vm891 = vcmp.gt.f32.partialorder %v817, 0.0
    %vm892 = vcmp.gt.f32.partialorder %v731, 0.0
    %vm893 = vcmp.gt.f32.partialorder %v820, 0.0
    %vm894 = vcmp.gt.f32.partialorder %v733, 0.0
    %vm895 = vcmp.gt.f32.partialorder %v822, 0.0
    %vm896 = vcmp.gt.f32.partialorder %v736, 0.0
    %vm897 = vcmp.gt.f32.partialorder %v825, 0.0
    %vm898 = vcmp.gt.f32.partialorder %v738, 0.0
    %vm899 = vcmp.gt.f32.partialorder %v827, 0.0
    %vm900 = vcmp.gt.f32.partialorder %v741, 0.0
    %vm901 = vcmp.gt.f32.partialorder %v830, 0.0
    %vm902 = vcmp.gt.f32.partialorder %v743, 0.0
    %vm903 = vcmp.gt.f32.partialorder %v832, 0.0
    %vm904 = vcmp.gt.f32.partialorder %v746, 0.0
    %vm905 = vcmp.gt.f32.partialorder %v835, 0.0
    %vm906 = vcmp.gt.f32.partialorder %v748, 0.0
    %vm907 = vcmp.gt.f32.partialorder %v837, 0.0
    %vm908 = vcmp.gt.f32.partialorder %v751, 0.0
    %vm909 = vcmp.gt.f32.partialorder %v840, 0.0
    %vm910 = vcmp.gt.f32.partialorder %v753, 0.0
    %vm911 = vcmp.gt.f32.partialorder %v842, 0.0
    %vm912 = vcmp.gt.f32.partialorder %v756, 0.0
    %vm913 = vcmp.gt.f32.partialorder %v845, 0.0
    %vm914 = vcmp.gt.f32.partialorder %v758, 0.0
    %vm915 = vcmp.gt.f32.partialorder %v847, 0.0
    %vm916 = vcmp.gt.f32.partialorder %v761, 0.0
    %vm917 = vcmp.gt.f32.partialorder %v850, 0.0
    %vm918 = vcmp.gt.f32.partialorder %v763, 0.0
    %vm919 = vcmp.gt.f32.partialorder %v852, 0.0
    %vm920 = vcmp.gt.f32.partialorder %v766, 0.0
    %vm921 = vcmp.gt.f32.partialorder %v855, 0.0
    %vm922 = vcmp.gt.f32.partialorder %v768, 0.0
    %vm923 = vcmp.gt.f32.partialorder %v857, 0.0
    %vm924 = vcmp.gt.f32.partialorder %v771, 0.0
    %vm925 = vcmp.gt.f32.partialorder %v860, 0.0
    %vm926 = vcmp.gt.f32.partialorder %v773, 0.0
    %vm927 = vcmp.gt.f32.partialorder %v862, 0.0
    %v928 = vmul.f32 %v696, 0.1
    %v929 = vmul.f32 %v785, 0.1
    %v930 = vmul.f32 %v698, 0.1
    %v931 = vmul.f32 %v787, 0.1
    %v932 = vmul.f32 %v701, 0.1
    %v933 = vmul.f32 %v790, 0.1
    %v934 = vmul.f32 %v703, 0.1
    %v935 = vmul.f32 %v792, 0.1
    %v936 = vmul.f32 %v706, 0.1
    %v937 = vmul.f32 %v795, 0.1
    %v938 = vmul.f32 %v708, 0.1
    %v939 = vmul.f32 %v797, 0.1
    %v940 = vmul.f32 %v711, 0.1
    %v941 = vmul.f32 %v800, 0.1
    %v942 = vmul.f32 %v713, 0.1
    %v943 = vmul.f32 %v802, 0.1
    %v944 = vmul.f32 %v716, 0.1
    %v945 = vmul.f32 %v805, 0.1
    %v946 = vmul.f32 %v718, 0.1
    %v947 = vmul.f32 %v807, 0.1
    %v948 = vmul.f32 %v721, 0.1
    %v949 = vmul.f32 %v810, 0.1
    %v950 = vmul.f32 %v723, 0.1
    %v951 = vmul.f32 %v812, 0.1
    %v952 = vmul.f32 %v726, 0.1
    %v953 = vmul.f32 %v815, 0.1
    %v954 = vmul.f32 %v728, 0.1
    %v955 = vmul.f32 %v817, 0.1
    %v956 = vmul.f32 %v731, 0.1
    %v957 = vmul.f32 %v820, 0.1
    %v958 = vmul.f32 %v733, 0.1
    %v959 = vmul.f32 %v822, 0.1
    %v960 = vmul.f32 %v736, 0.1
    %v961 = vmul.f32 %v825, 0.1
    %v962 = vmul.f32 %v738, 0.1
    %v963 = vmul.f32 %v827, 0.1
    %v964 = vmul.f32 %v741, 0.1
    %v965 = vmul.f32 %v830, 0.1
    %v966 = vmul.f32 %v743, 0.1
    %v967 = vmul.f32 %v832, 0.1
    %v968 = vmul.f32 %v746, 0.1
    %v969 = vmul.f32 %v835, 0.1
    %v970 = vmul.f32 %v748, 0.1
    %v971 = vmul.f32 %v837, 0.1
    %v972 = vmul.f32 %v751, 0.1
    %v973 = vmul.f32 %v840, 0.1
    %v974 = vmul.f32 %v753, 0.1
    %v975 = vmul.f32 %v842, 0.1
    %v976 = vmul.f32 %v756, 0.1
    %v977 = vmul.f32 %v845, 0.1
    %v978 = vmul.f32 %v758, 0.1
    %v979 = vmul.f32 %v847, 0.1
    %v980 = vmul.f32 %v761, 0.1
    %v981 = vmul.f32 %v850, 0.1
    %v982 = vmul.f32 %v763, 0.1
    %v983 = vmul.f32 %v852, 0.1
    %v984 = vmul.f32 %v766, 0.1
    %v985 = vmul.f32 %v855, 0.1
    %v986 = vmul.f32 %v768, 0.1
    %v987 = vmul.f32 %v857, 0.1
    %v988 = vmul.f32 %v771, 0.1
    %v989 = vmul.f32 %v860, 0.1
    %v990 = vmul.f32 %v773, 0.1
    %v991 = vmul.f32 %v862, 0.1
    %v992 = vsel %vm864, %v696, %v928
    %v993 = vsel %vm865, %v785, %v929
    %v994 = vsel %vm866, %v698, %v930
    %v995 = vsel %vm867, %v787, %v931
    %v996 = vsel %vm868, %v701, %v932
    %v997 = vsel %vm869, %v790, %v933
    %v998 = vsel %vm870, %v703, %v934
    %v999 = vsel %vm871, %v792, %v935
    %v1000 = vsel %vm872, %v706, %v936
    %v1001 = vsel %vm873, %v795, %v937
    %v1002 = vsel %vm874, %v708, %v938
    %v1003 = vsel %vm875, %v797, %v939
    %v1004 = vsel %vm876, %v711, %v940
    %v1005 = vsel %vm877, %v800, %v941
    %v1006 = vsel %vm878, %v713, %v942
    %v1007 = vsel %vm879, %v802, %v943
    %v1008 = vsel %vm880, %v716, %v944
    %v1009 = vsel %vm881, %v805, %v945
    %v1010 = vsel %vm882, %v718, %v946
    %v1011 = vsel %vm883, %v807, %v947
    %v1012 = vsel %vm884, %v721, %v948
    %v1013 = vsel %vm885, %v810, %v949
    %v1014 = vsel %vm886, %v723, %v950
    %v1015 = vsel %vm887, %v812, %v951
    %v1016 = vsel %vm888, %v726, %v952
    %v1017 = vsel %vm889, %v815, %v953
    %v1018 = vsel %vm890, %v728, %v954
    %v1019 = vsel %vm891, %v817, %v955
    %v1020 = vsel %vm892, %v731, %v956
    %v1021 = vsel %vm893, %v820, %v957
    %v1022 = vsel %vm894, %v733, %v958
    %v1023 = vsel %vm895, %v822, %v959
    %v1024 = vsel %vm896, %v736, %v960
    %v1025 = vsel %vm897, %v825, %v961
    %v1026 = vsel %vm898, %v738, %v962
    %v1027 = vsel %vm899, %v827, %v963
    %v1028 = vsel %vm900, %v741, %v964
    %v1029 = vsel %vm901, %v830, %v965
    %v1030 = vsel %vm902, %v743, %v966
    %v1031 = vsel %vm903, %v832, %v967
    %v1032 = vsel %vm904, %v746, %v968
    %v1033 = vsel %vm905, %v835, %v969
    %v1034 = vsel %vm906, %v748, %v970
    %v1035 = vsel %vm907, %v837, %v971
    %v1036 = vsel %vm908, %v751, %v972
    %v1037 = vsel %vm909, %v840, %v973
    %v1038 = vsel %vm910, %v753, %v974
    %v1039 = vsel %vm911, %v842, %v975
    %v1040 = vsel %vm912, %v756, %v976
    %v1041 = vsel %vm913, %v845, %v977
    %v1042 = vsel %vm914, %v758, %v978
    %v1043 = vsel %vm915, %v847, %v979
    %v1044 = vsel %vm916, %v761, %v980
    %v1045 = vsel %vm917, %v850, %v981
    %v1046 = vsel %vm918, %v763, %v982
    %v1047 = vsel %vm919, %v852, %v983
    %v1048 = vsel %vm920, %v766, %v984
    %v1049 = vsel %vm921, %v855, %v985
    %v1050 = vsel %vm922, %v768, %v986
    %v1051 = vsel %vm923, %v857, %v987
    %v1052 = vsel %vm924, %v771, %v988
    %v1053 = vsel %vm925, %v860, %v989
    %v1054 = vsel %vm926, %v773, %v990
    %v1055 = vsel %vm927, %v862, %v991
    %v1056 = vpack.c.bf16 %v993, %v992
    %v1057 = vpack.c.bf16 %v995, %v994
    %v1058 = vpack.c.bf16 %v997, %v996
    %v1059 = vpack.c.bf16 %v999, %v998
    %v1060 = vpack.c.bf16 %v1001, %v1000
    %v1061 = vpack.c.bf16 %v1003, %v1002
    %v1062 = vpack.c.bf16 %v1005, %v1004
    %v1063 = vpack.c.bf16 %v1007, %v1006
    %v1064 = vpack.c.bf16 %v1009, %v1008
    %v1065 = vpack.c.bf16 %v1011, %v1010
    %v1066 = vpack.c.bf16 %v1013, %v1012
    %v1067 = vpack.c.bf16 %v1015, %v1014
    %v1068 = vpack.c.bf16 %v1017, %v1016
    %v1069 = vpack.c.bf16 %v1019, %v1018
    %v1070 = vpack.c.bf16 %v1021, %v1020
    %v1071 = vpack.c.bf16 %v1023, %v1022
    %v1072 = vpack.c.bf16 %v1025, %v1024
    %v1073 = vpack.c.bf16 %v1027, %v1026
    %v1074 = vpack.c.bf16 %v1029, %v1028
    %v1075 = vpack.c.bf16 %v1031, %v1030
    %v1076 = vpack.c.bf16 %v1033, %v1032
    %v1077 = vpack.c.bf16 %v1035, %v1034
    %v1078 = vpack.c.bf16 %v1037, %v1036
    %v1079 = vpack.c.bf16 %v1039, %v1038
    %v1080 = vpack.c.bf16 %v1041, %v1040
    %v1081 = vpack.c.bf16 %v1043, %v1042
    %v1082 = vpack.c.bf16 %v1045, %v1044
    %v1083 = vpack.c.bf16 %v1047, %v1046
    %v1084 = vpack.c.bf16 %v1049, %v1048
    %v1085 = vpack.c.bf16 %v1051, %v1050
    %v1086 = vpack.c.bf16 %v1053, %v1052
    %v1087 = vpack.c.bf16 %v1055, %v1054
    %1088 = vst [vmem:[#allocation4] sm:$0xff] %v1056
    %1089 = vst [vmem:[#allocation4 + $0x8] sm:$0xff] %v1057
    %1090 = vst [vmem:[#allocation4 + $0x10] sm:$0xff] %v1058
    %1091 = vst [vmem:[#allocation4 + $0x18] sm:$0xff] %v1059
    %1092 = vst [vmem:[#allocation4 + $0x20] sm:$0xff] %v1060
    %1093 = vst [vmem:[#allocation4 + $0x28] sm:$0xff] %v1061
    %1094 = vst [vmem:[#allocation4 + $0x30] sm:$0xff] %v1062
    %1095 = vst [vmem:[#allocation4 + $0x38] sm:$0xff] %v1063
    %1096 = vst [vmem:[#allocation4 + $0x40] sm:$0xff] %v1064
    %1097 = vst [vmem:[#allocation4 + $0x48] sm:$0xff] %v1065
    %1098 = vst [vmem:[#allocation4 + $0x50] sm:$0xff] %v1066
    %1099 = vst [vmem:[#allocation4 + $0x58] sm:$0xff] %v1067
    %1100 = vst [vmem:[#allocation4 + $0x60] sm:$0xff] %v1068
    %1101 = vst [vmem:[#allocation4 + $0x68] sm:$0xff] %v1069
    %1102 = vst [vmem:[#allocation4 + $0x70] sm:$0xff] %v1070
    %1103 = vst [vmem:[#allocation4 + $0x78] sm:$0xff] %v1071
    %1104 = vst [vmem:[#allocation4 + $0x80] sm:$0xff] %v1072
    %1105 = vst [vmem:[#allocation4 + $0x88] sm:$0xff] %v1073
    %1106 = vst [vmem:[#allocation4 + $0x90] sm:$0xff] %v1074
    %1107 = vst [vmem:[#allocation4 + $0x98] sm:$0xff] %v1075
    %1108 = vst [vmem:[#allocation4 + $0xa0] sm:$0xff] %v1076
    %1109 = vst [vmem:[#allocation4 + $0xa8] sm:$0xff] %v1077
    %1110 = vst [vmem:[#allocation4 + $0xb0] sm:$0xff] %v1078
    %1111 = vst [vmem:[#allocation4 + $0xb8] sm:$0xff] %v1079
    %1112 = vst [vmem:[#allocation4 + $0xc0] sm:$0xff] %v1080
    %1113 = vst [vmem:[#allocation4 + $0xc8] sm:$0xff] %v1081
    %1114 = vst [vmem:[#allocation4 + $0xd0] sm:$0xff] %v1082
    %1115 = vst [vmem:[#allocation4 + $0xd8] sm:$0xff] %v1083
    %1116 = vst [vmem:[#allocation4 + $0xe0] sm:$0xff] %v1084
    %1117 = vst [vmem:[#allocation4 + $0xe8] sm:$0xff] %v1085
    %1118 = vst [vmem:[#allocation4 + $0xf0] sm:$0xff] %v1086
    %1119 = vst [vmem:[#allocation4 + $0xf8] sm:$0xff] %v1087
    // Predicated region
    $region22: #{tpu_custom_call.1} parent=1 // pred_check
      _
    $region23: #{tpu_custom_call.1} parent=1 // pred_check_branch
      %1121 = sbr.rel (0) target = $region25
    $region24: #{tpu_custom_call.1} parent=1 // pred_region
      %1123 = vsyncadd [#allocation3], 0
      %s1124 = sshll.u32 [#allocation2], 4
      %s1125 = int_to_ptr.vmem [resolvable:$true] %s1124
      %s1126 = sshll.u32 %s5, 4
      %s1127 = int_to_ptr.hbm [resolvable:$true] %s1126
      %1132 = dma.vmem_to_hbm [thread:$0]  %s1125, 4096, %s1127, [#allocation3], 128, 128, 8
    $region25: #{tpu_custom_call.1} parent=1 // pred_fallthru
      _
    // Predicated region
    $region26: #{tpu_custom_call.1} parent=1 // pred_check
      _
    $region27: #{tpu_custom_call.1} parent=1 // pred_check_branch
      %1134 = sbr.rel (0) target = $region29
    $region28: #{tpu_custom_call.1} parent=1 // pred_region
      %1136 = vsyncadd [#allocation5], 0
      %s1137 = sshll.u32 [#allocation4], 4
      %s1138 = int_to_ptr.vmem [resolvable:$true] %s1137
      %s1139 = sshll.u32 %s6, 4
      %s1140 = int_to_ptr.hbm [resolvable:$true] %s1139
      %1145 = dma.vmem_to_hbm [thread:$0]  %s1138, 4096, %s1140, [#allocation5], 128, 128, 8
    $region29: #{tpu_custom_call.1} parent=1 // pred_fallthru
      _
    // Predicated region
    $region30: #{tpu_custom_call.1} parent=1 // pred_check
      _
    $region31: #{tpu_custom_call.1} parent=1 // pred_check_branch
      %1147 = sbr.rel (0) target = $region33
    $region32: #{tpu_custom_call.1} parent=1 // pred_region
      %1149 = dma.done [#allocation3], 4096
    $region33: #{tpu_custom_call.1} parent=1 // pred_fallthru
      _
    // Predicated region
    $region34: #{tpu_custom_call.1} parent=1 // pred_check
      _
    $region35: #{tpu_custom_call.1} parent=1 // pred_check_branch
      %1151 = sbr.rel (0) target = $region37
    $region36: #{tpu_custom_call.1} parent=1 // pred_region
      %1153 = dma.done [#allocation5], 4096
    $region37: #{tpu_custom_call.1} parent=1 // pred_fallthru
      _
    %1154 = vsyncpa [#allocation3], 1
    %1155 = vsyncpa [#allocation5], 1

</llo_original>
